<compile_context>
chip_gen: v5e
topology: v5e:2x2
jax: 0.10.0
libtpu: 0.0.40
codegen_flags: <defaults>
</compile_context>

<pallas_src>
import functools
import math

import jax
import jax.numpy as jnp
from jax.experimental import pallas as pl
from jax.experimental.pallas import tpu as pltpu

EPS = 1e-5     # nn.BatchNorm2d default eps
LANE = 128


def _round_up(x, m):
    return -(-x // m) * m


# --------------------------------------------------------------------------- #
# in-kernel helpers
# --------------------------------------------------------------------------- #
def _bn_scale_shift(stats, gamma, beta, inv_count):
    """Fold training-mode BN into y*scale + shift (stats = [sum; sumsq], (2, C))."""
    mean = stats[0:1, :] * inv_count
    # NOTE: single-pass E[x^2]-E[x]^2; fine for zero-ish-mean conv activations.
    var = jnp.maximum(stats[1:2, :] * inv_count - mean * mean, 0.0)
    scale = gamma * jax.lax.rsqrt(var + EPS)   # rsqrt -> EUP slot
    shift = beta - mean * scale
    return scale, shift


def _sum_sumsq(y):
    """(rows, C) f32 -> (2, C) f32 [sum; sum-of-squares]."""
    return jnp.concatenate(
        [jnp.sum(y, axis=0, keepdims=True),
         jnp.sum(y * y, axis=0, keepdims=True)], axis=0)


# --------------------------------------------------------------------------- #
# K1: conv1 (1x1) + per-tile batch-stat partials
# --------------------------------------------------------------------------- #
def conv1x1_stats_kernel(x_ref, w_ref, y_ref, stats_ref):
    y = jnp.dot(x_ref[...], w_ref[...], preferred_element_type=jnp.float32)
    y_ref[...] = y.astype(y_ref.dtype)          # bf16 HBM store
    stats_ref[...] = _sum_sumsq(y)              # per-tile partial, f32


# --------------------------------------------------------------------------- #
# K2: bn1 (folded) + relu + conv2 (3x3, pad=1) as a single bf16 im2col matmul
# --------------------------------------------------------------------------- #
def bn_relu_conv3x3_stats_kernel(h_ref, s_in_ref, g_ref, b_ref, w_ref,
                                 y_ref, stats_ref, *, inv_count):
    H, W, C = h_ref.shape                        # leading batch dim squeezed
    scale, shift = _bn_scale_shift(s_in_ref[...], g_ref[...], b_ref[...],
                                   inv_count)
    a32 = jnp.maximum(h_ref[...].astype(jnp.float32) * scale.reshape(1, 1, C)
                      + shift.reshape(1, 1, C), 0.0)
    a = a32.astype(jnp.bfloat16)                 # build im2col slab in bf16

    zrow = jnp.zeros((1, W, C), jnp.bfloat16)
    zcol = jnp.zeros((H, 1, C), jnp.bfloat16)
    taps = []
    for oy in (-1, 0, 1):
        if oy == -1:
            vy = jnp.concatenate([zrow, a[:-1]], axis=0)
        elif oy == 1:
            vy = jnp.concatenate([a[1:], zrow], axis=0)
        else:
            vy = a
        for ox in (-1, 0, 1):
            if ox == -1:
                v = jnp.concatenate([zcol, vy[:, :-1]], axis=1)
            elif ox == 1:
                v = jnp.concatenate([vy[:, 1:], zcol], axis=1)
            else:
                v = vy
            taps.append(v)
    cols = jnp.concatenate(taps, axis=-1).reshape(H * W, 9 * C)   # bf16
    y = jnp.dot(cols, w_ref[...], preferred_element_type=jnp.float32)
    y_ref[...] = y.reshape(H, W, C).astype(y_ref.dtype)
    stats_ref[...] = _sum_sumsq(y)


# --------------------------------------------------------------------------- #
# K3: bn2 (folded) + relu + conv3 (1x1) + per-tile stats
# --------------------------------------------------------------------------- #
def bn_relu_conv1x1_stats_kernel(v_ref, s_in_ref, g_ref, b_ref, w_ref,
                                 y_ref, stats_ref, *, inv_count):
    scale, shift = _bn_scale_shift(s_in_ref[...], g_ref[...], b_ref[...],
                                   inv_count)
    a = jnp.maximum(v_ref[...].astype(jnp.float32) * scale + shift, 0.0)
    y = jnp.dot(a.astype(jnp.bfloat16), w_ref[...],
                preferred_element_type=jnp.float32)
    y_ref[...] = y.astype(y_ref.dtype)
    stats_ref[...] = _sum_sumsq(y)


# --------------------------------------------------------------------------- #
# K4: bn3 (folded) + residual add + relu (identity x read only here, bf16)
# --------------------------------------------------------------------------- #
def bn_residual_relu_kernel(v_ref, s_ref, g_ref, b_ref, x_ref, out_ref, *,
                            inv_count):
    scale, shift = _bn_scale_shift(s_ref[...], g_ref[...], b_ref[...], inv_count)
    out = jnp.maximum(v_ref[...].astype(jnp.float32) * scale + shift
                      + x_ref[...].astype(jnp.float32), 0.0)
    out_ref[...] = out.astype(out_ref.dtype)


# --------------------------------------------------------------------------- #
# wrapper helpers
# --------------------------------------------------------------------------- #
def _vmem_budget_bytes():
    """Generation-aware VMEM budget (e.g. ~48 MiB on v7x, ~96 MiB on v5e/v6e)."""
    try:
        cap = int(pltpu.get_tpu_info().vmem_capacity_bytes)
    except Exception:
        cap = 64 << 20
    return max(min((cap * 3) // 4, 100 << 20), 16 << 20)


def _vmem_limit(blocks, budget, extra=0):
    """Double-buffered resident-set estimate (+ slack), clamped to the budget."""
    total = extra
    for shape, dtype in blocks:
        total += 2 * math.prod(shape) * jnp.dtype(dtype).itemsize
    return int(min(max(total + (4 << 20), 24 << 20), budget))


def _pick_row_tile(nhw, row_bytes, budget):
    """Largest multiple-of-16 divisor of NHW with >=2 grid steps that fits VMEM."""
    cands = [c for c in (4096, 2048, 1024, 512, 256, 128, 64, 32, 16)
             if nhw % c == 0]
    for c in cands:
        if nhw // c >= 2 and 2 * c * row_bytes <= budget:
            return c
    for c in cands:
        if 2 * c * row_bytes <= budget:
            return c
    return cands[-1] if cands else nhw


# --------------------------------------------------------------------------- #
# wrapper
# --------------------------------------------------------------------------- #
def bottleneck_forward(x_nchw, params):
    """x_nchw: (N, Cin, H, W) f32; params are PyTorch-shaped (OIHW convs, 1D bn)."""
    w1, g1, b1, w2, g2, b2, w3, g3, b3 = params
    N, Cin, H, W = x_nchw.shape
    Cr = w1.shape[0]
    Cout = w3.shape[0]
    assert Cin == Cout, "residual add requires in_channels == out_channels"

    f32, bf16 = jnp.float32, jnp.bfloat16
    Cinp = _round_up(Cin, LANE)
    Crp = _round_up(Cr, LANE)
    Coutp = _round_up(Cout, LANE)
    assert Cinp == Coutp

    NHW = N * H * W
    inv_count = 1.0 / float(NHW)
    budget = _vmem_budget_bytes()

    # Heaviest row-tiled per-row footprint (K4: v + out + x, all bf16).
    row_bytes = (Crp + 2 * Coutp + Cinp) * 2
    RT = _pick_row_tile(NHW, row_bytes, budget)
    nrt = NHW // RT

    # ---- boundary glue: NCHW -> channels-last rows, pad channels, bf16 once ----
    x_nhwc = jnp.transpose(x_nchw, (0, 2, 3, 1)).astype(f32)
    x_nhwc = jnp.pad(x_nhwc, ((0, 0), (0, 0), (0, 0), (0, Cinp - Cin)))
    x2d = x_nhwc.reshape(NHW, Cinp).astype(bf16)

    def pad_oihw(w, op, ip):
        o, i = w.shape[0], w.shape[1]
        return jnp.pad(w.astype(f32), ((0, op - o), (0, ip - i), (0, 0), (0, 0)))

    w1p = pad_oihw(w1, Crp, Cinp)
    w2p = pad_oihw(w2, Crp, Crp)
    w3p = pad_oihw(w3, Coutp, Crp)
    w1k = jnp.transpose(w1p[:, :, 0, 0], (1, 0)).astype(bf16)          # (Cinp, Crp)
    w2k = jnp.transpose(w2p, (2, 3, 1, 0)).reshape(9 * Crp, Crp).astype(bf16)
    w3k = jnp.transpose(w3p[:, :, 0, 0], (1, 0)).astype(bf16)          # (Crp, Coutp)

    def pad_vec(v, cp):
        return jnp.pad(v.astype(f32), (0, cp - v.shape[0])).reshape(1, cp)

    g1k, b1k = pad_vec(g1, Crp), pad_vec(b1, Crp)
    g2k, b2k = pad_vec(g2, Crp), pad_vec(b2, Crp)
    g3k, b3k = pad_vec(g3, Coutp), pad_vec(b3, Coutp)

    # ---- K1: conv1 + per-tile stats (row-tiled, fully parallel grid) ----------
    h1, s1p = pl.pallas_call(
        conv1x1_stats_kernel,
        out_shape=(jax.ShapeDtypeStruct((NHW, Crp), bf16),
                   jax.ShapeDtypeStruct((nrt, 2, Crp), f32)),
        grid_spec=pltpu.PrefetchScalarGridSpec(
            num_scalar_prefetch=0, grid=(nrt,),
            in_specs=[pl.BlockSpec((RT, Cinp), lambda i: (i, 0)),
                      pl.BlockSpec((Cinp, Crp), lambda i: (0, 0))],
            out_specs=[pl.BlockSpec((RT, Crp), lambda i: (i, 0)),
                       pl.BlockSpec((None, 2, Crp), lambda i: (i, 0, 0))]),
        compiler_params=pltpu.CompilerParams(
            dimension_semantics=("parallel",),
            vmem_limit_bytes=_vmem_limit(
                [((RT, Cinp), bf16), ((Cinp, Crp), bf16),
                 ((RT, Crp), bf16), ((2, Crp), f32), ((RT, Crp), f32)], budget)),
    )(x2d, w1k)
    s1 = jnp.sum(s1p, axis=0)                                   # (2, Crp)

    # ---- K2: bn1 + relu + conv2 (3x3) + per-tile stats (batch-tiled) ----------
    im2col_extra = (H * W * 9 * Crp * 2) * 2 + H * W * Crp * 14
    h2, s2p = pl.pallas_call(
        functools.partial(bn_relu_conv3x3_stats_kernel, inv_count=inv_count),
        out_shape=(jax.ShapeDtypeStruct((N, H, W, Crp), bf16),
                   jax.ShapeDtypeStruct((N, 2, Crp), f32)),
        grid_spec=pltpu.PrefetchScalarGridSpec(
            num_scalar_prefetch=0, grid=(N,),
            in_specs=[pl.BlockSpec((None, H, W, Crp), lambda n: (n, 0, 0, 0)),
                      pl.BlockSpec((2, Crp), lambda n: (0, 0)),
                      pl.BlockSpec((1, Crp), lambda n: (0, 0)),
                      pl.BlockSpec((1, Crp), lambda n: (0, 0)),
                      pl.BlockSpec((9 * Crp, Crp), lambda n: (0, 0))],
            out_specs=[pl.BlockSpec((None, H, W, Crp), lambda n: (n, 0, 0, 0)),
                       pl.BlockSpec((None, 2, Crp), lambda n: (n, 0, 0))]),
        compiler_params=pltpu.CompilerParams(
            dimension_semantics=("parallel",),
            vmem_limit_bytes=_vmem_limit(
                [((H, W, Crp), bf16), ((2, Crp), f32), ((1, Crp), f32),
                 ((1, Crp), f32), ((9 * Crp, Crp), bf16),
                 ((H, W, Crp), bf16), ((2, Crp), f32)],
                budget, extra=im2col_extra)),
    )(h1.reshape(N, H, W, Crp), s1, g1k, b1k, w2k)
    s2 = jnp.sum(s2p, axis=0)

    # ---- K3: bn2 + relu + conv3 (1x1) + per-tile stats (row-tiled) ------------
    h3, s3p = pl.pallas_call(
        functools.partial(bn_relu_conv1x1_stats_kernel, inv_count=inv_count),
        out_shape=(jax.ShapeDtypeStruct((NHW, Coutp), bf16),
                   jax.ShapeDtypeStruct((nrt, 2, Coutp), f32)),
        grid_spec=pltpu.PrefetchScalarGridSpec(
            num_scalar_prefetch=0, grid=(nrt,),
            in_specs=[pl.BlockSpec((RT, Crp), lambda i: (i, 0)),
                      pl.BlockSpec((2, Crp), lambda i: (0, 0)),
                      pl.BlockSpec((1, Crp), lambda i: (0, 0)),
                      pl.BlockSpec((1, Crp), lambda i: (0, 0)),
                      pl.BlockSpec((Crp, Coutp), lambda i: (0, 0))],
            out_specs=[pl.BlockSpec((RT, Coutp), lambda i: (i, 0)),
                       pl.BlockSpec((None, 2, Coutp), lambda i: (i, 0, 0))]),
        compiler_params=pltpu.CompilerParams(
            dimension_semantics=("parallel",),
            vmem_limit_bytes=_vmem_limit(
                [((RT, Crp), bf16), ((2, Crp), f32), ((1, Crp), f32),
                 ((1, Crp), f32), ((Crp, Coutp), bf16),
                 ((RT, Coutp), bf16), ((2, Coutp), f32),
                 ((RT, Coutp), f32)], budget)),
    )(h2.reshape(NHW, Crp), s2, g2k, b2k, w3k)
    s3 = jnp.sum(s3p, axis=0)

    # ---- K4: bn3 + residual + relu (output aliased onto h3, x read as bf16) ---
    out2d = pl.pallas_call(
        functools.partial(bn_residual_relu_kernel, inv_count=inv_count),
        out_shape=jax.ShapeDtypeStruct((NHW, Coutp), bf16),
        grid_spec=pltpu.PrefetchScalarGridSpec(
            num_scalar_prefetch=0, grid=(nrt,),
            in_specs=[pl.BlockSpec((RT, Coutp), lambda i: (i, 0)),
                      pl.BlockSpec((2, Coutp), lambda i: (0, 0)),
                      pl.BlockSpec((1, Coutp), lambda i: (0, 0)),
                      pl.BlockSpec((1, Coutp), lambda i: (0, 0)),
                      pl.BlockSpec((RT, Cinp), lambda i: (i, 0))],
            out_specs=pl.BlockSpec((RT, Coutp), lambda i: (i, 0))),
        input_output_aliases={0: 0},
        compiler_params=pltpu.CompilerParams(
            dimension_semantics=("parallel",),
            vmem_limit_bytes=_vmem_limit(
                [((RT, Coutp), bf16), ((2, Coutp), f32), ((1, Coutp), f32),
                 ((1, Coutp), f32), ((RT, Cinp), bf16),
                 ((RT, Coutp), bf16)], budget)),
    )(h3, s3, g3k, b3k, x2d)

    # ---- glue: rows -> NHWC -> strip channel padding -> f32 -> NCHW -----------
    out = out2d.reshape(N, H, W, Coutp)[..., :Cout].astype(f32)
    return jnp.transpose(out, (0, 3, 1, 2))


# --------------------------------------------------------------------------- #
# pure-JAX reference (NCHW / OIHW, training-mode BN, f32 HIGHEST precision)
# --------------------------------------------------------------------------- #
def ref_forward(x, w1, g1, b1, w2, g2, b2, w3, g3, b3):
    def conv(v, w, pad=0):
        return jax.lax.conv_general_dilated(
            v, w, window_strides=(1, 1), padding=[(pad, pad), (pad, pad)],
            dimension_numbers=("NCHW", "OIHW", "NCHW"),
            precision=jax.lax.Precision.HIGHEST)

    def bn(v, g, b):
        mu = jnp.mean(v, axis=(0, 2, 3), keepdims=True)
        var = jnp.mean((v - mu) ** 2, axis=(0, 2, 3), keepdims=True)
        return (v - mu) * jax.lax.rsqrt(var + EPS) * g.reshape(1, -1, 1, 1) \
            + b.reshape(1, -1, 1, 1)

    out = jax.nn.relu(bn(conv(x, w1), g1, b1))
    out = jax.nn.relu(bn(conv(out, w2, pad=1), g2, b2))
    out = bn(conv(out, w3), g3, b3)
    return jax.nn.relu(out + x)


if __name__ == "__main__":
    key = jax.random.PRNGKey(0)
    N, Cin, H, W = 2, 32, 16, 16
    Cout = Cin                 # residual add implies in_channels == out_channels
    Cr = Cout // 4             # expansion = 4

    ks = jax.random.split(key, 4)
    x = jax.random.normal(ks[0], (N, Cin, H, W), jnp.float32)

    # Deterministic synthetic parameters (PyTorch shapes; bn defaults gamma=1, beta=0)
    w1 = jax.random.normal(ks[1], (Cr, Cin, 1, 1), jnp.float32) / jnp.sqrt(float(Cin))
    w2 = jax.random.normal(ks[2], (Cr, Cr, 3, 3), jnp.float32) / jnp.sqrt(9.0 * Cr)
    w3 = jax.random.normal(ks[3], (Cout, Cr, 1, 1), jnp.float32) / jnp.sqrt(float(Cr))
    g1, b1 = jnp.ones((Cr,), jnp.float32), jnp.zeros((Cr,), jnp.float32)
    g2, b2 = jnp.ones((Cr,), jnp.float32), jnp.zeros((Cr,), jnp.float32)
    g3, b3 = jnp.ones((Cout,), jnp.float32), jnp.zeros((Cout,), jnp.float32)

    out = bottleneck_forward(x, (w1, g1, b1, w2, g2, b2, w3, g3, b3))
    out = jax.block_until_ready(out)

    ref = ref_forward(x, w1, g1, b1, w2, g2, b2, w3, g3, b3)
    assert out.shape == (N, Cout, H, W), out.shape
    # bf16 MXU operands + bf16 HBM intermediates across three BN-normalized stages:
    # compare against the all-f32 reference at a bf16-appropriate tolerance.
    err = float(jnp.max(jnp.abs(out - ref)))
    assert jnp.allclose(out, ref, atol=1e-1, rtol=1e-1), err
    print("KERNEL_OK")
</pallas_src>

<mosaic_0001>
module attributes {stable_mosaic.version = 11 : i64} {
  func.func @conv1x1_stats_kernel(%arg0: i32, %arg1: memref<256x128xbf16, #tpu.memory_space<vmem>>, %arg2: memref<128x128xbf16, #tpu.memory_space<vmem>>, %arg3: memref<256x128xbf16, #tpu.memory_space<vmem>>, %arg4: memref<1x2x128xf32, #tpu.memory_space<vmem>>) attributes {dimension_semantics = [#tpu.dimension_semantics<parallel>], iteration_bounds = array<i64: 2>, scalar_prefetch = 0 : i64, scratch_operands = 0 : i64, tpu.core_type = #tpu.core_type<tc>, window_params = [{transform_indices = @transform_0, window_bounds = array<i64: 256, 128>}, {pipeline_mode = #tpu.pipeline_mode<synchronous>, transform_indices = @transform_1, window_bounds = array<i64: 128, 128>}, {transform_indices = @transform_2, window_bounds = array<i64: 256, 128>}, {transform_indices = @transform_3, window_bounds = array<i64: 1, 2, 128>}]} {
    %c0 = arith.constant 0 : index
    %c0_0 = arith.constant 0 : index
    %0 = vector.load %arg1[%c0, %c0_0] : memref<256x128xbf16, #tpu.memory_space<vmem>>, vector<256x128xbf16>
    %c0_1 = arith.constant 0 : index
    %c0_2 = arith.constant 0 : index
    %1 = vector.load %arg2[%c0_1, %c0_2] : memref<128x128xbf16, #tpu.memory_space<vmem>>, vector<128x128xbf16>
    %cst = arith.constant dense<0.000000e+00> : vector<256x128xf32>
    %2 = tpu.matmul %0, %1, %cst {dimension_numbers = #tpu.dot_dimension_numbers<[1], [0], [0], [1], [0, 0, 1, 1], [], []>} : vector<256x128xbf16>, vector<128x128xbf16>, vector<256x128xf32> -> vector<256x128xf32>
    %3 = arith.truncf %2 : vector<256x128xf32> to vector<256x128xbf16>
    %c0_3 = arith.constant 0 : index
    %c0_4 = arith.constant 0 : index
    %4 = vector.load %arg3[%c0_3, %c0_4] : memref<256x128xbf16, #tpu.memory_space<vmem>>, vector<256x128xbf16>
    tpu.vector_store %arg3[%c0_3, %c0_4], %3 {strides = array<i32>} : memref<256x128xbf16, #tpu.memory_space<vmem>>, vector<256x128xbf16>,
    %cst_5 = arith.constant dense<0.000000e+00> : vector<128xf32>
    %5 = vector.multi_reduction <add>, %2, %cst_5 [0] : vector<256x128xf32> to vector<128xf32>
    %6 = vector.shape_cast %5 : vector<128xf32> to vector<1x128xf32>
    %7 = arith.mulf %2, %2 : vector<256x128xf32>
    %cst_6 = arith.constant dense<0.000000e+00> : vector<128xf32>
    %8 = vector.multi_reduction <add>, %7, %cst_6 [0] : vector<256x128xf32> to vector<128xf32>
    %9 = vector.shape_cast %8 : vector<128xf32> to vector<1x128xf32>
    %10 = tpu.concatenate %6, %9 in 0 : vector<1x128xf32>, vector<1x128xf32> -> vector<2x128xf32>
    %c0_7 = arith.constant 0 : index
    %c0_8 = arith.constant 0 : index
    %c0_9 = arith.constant 0 : index
    %11 = vector.load %arg4[%c0_7, %c0_8, %c0_9] : memref<1x2x128xf32, #tpu.memory_space<vmem>>, vector<1x2x128xf32>
    %12 = vector.shape_cast %11 : vector<1x2x128xf32> to vector<2x128xf32>
    %13 = vector.shape_cast %10 : vector<2x128xf32> to vector<1x2x128xf32>
    tpu.vector_store %arg4[%c0_7, %c0_8, %c0_9], %13 {strides = array<i32>} : memref<1x2x128xf32, #tpu.memory_space<vmem>>, vector<1x2x128xf32>,
    return
  }
  func.func @transform_0(%arg0: i32) -> (i32, i32) {
    %c0_i32 = arith.constant 0 : i32
    %c0_i32_0 = arith.constant 0 : i32
    return %arg0, %c0_i32 : i32, i32
  }
  func.func @transform_1(%arg0: i32) -> (i32, i32) {
    %c0_i32 = arith.constant 0 : i32
    %c0_i32_0 = arith.constant 0 : i32
    %c0_i32_1 = arith.constant 0 : i32
    return %c0_i32, %c0_i32_0 : i32, i32
  }
  func.func @transform_2(%arg0: i32) -> (i32, i32) {
    %c0_i32 = arith.constant 0 : i32
    %c0_i32_0 = arith.constant 0 : i32
    return %arg0, %c0_i32 : i32, i32
  }
  func.func @transform_3(%arg0: i32) -> (i32, i32, i32) {
    %c0_i32 = arith.constant 0 : i32
    %c0_i32_0 = arith.constant 0 : i32
    %c0_i32_1 = arith.constant 0 : i32
    return %arg0, %c0_i32, %c0_i32_0 : i32, i32, i32
  }
}

</mosaic_0001>

<llo_original>
// kernel: tpu_custom_call.1
$region0: #{tpu_custom_call.1}
  #allocation0 [shape = 'u32[]', space=smem, size = 0x4, offset = 0x4, fixed_abs, tag = 'smem constant byte address 0x4 - core index']
  #allocation1 [shape = 'u32[72,128]{1,0:T(1,128)}', space=vmem, size = 0x9000, scoped, tag = 'internal scratch']
  %s0 = inlined_call_operand.hbm [shape: bf16[512,128], index: 0, kind: input, shape index: {}]
  %s1 = inlined_call_operand.hbm [shape: bf16[128,128], index: 1, kind: input, shape index: {}]
  %s2 = inlined_call_operand.hbm [shape: bf16[512,128], index: 2, kind: output, shape index: {0}]
  %s3 = inlined_call_operand.hbm [shape: f32[2,2,128], index: 3, kind: output, shape index: {1}]
  %4 = xla_tuple %s2, %s3
  %s5 = sld [smem:[#allocation0]]
  $region57: #{tpu_custom_call.1} parent=0
    _
  %s7 = ssub.s32 1, %s5
  %s8 = scalar_select 0, %s7, %s5
  $region1: #{tpu_custom_call.1} parent=0
    #allocation2 [shape = 'u8[131072]{0}', space=vmem, size = 0x20000, scoped, tag = 'input window, operand 0']
    #allocation3 [shape = 's32[2]{0}', space=sflag, size = 0x8, scoped, tag = 'scoped memory for tpu_custom_call.1']
    #allocation4 [shape = 's32[2]{0}', space=sflag, size = 0x8, scoped, tag = 'scoped memory for tpu_custom_call.1']
    #allocation5 [shape = 'u8[32768]{0}', space=vmem, size = 0x8000, scoped, tag = 'input window, operand 1, single buffered']
    #allocation6 [shape = 's32[1]{0}', space=sflag, size = 0x4, scoped, tag = 'scoped memory for tpu_custom_call.1']
    #allocation7 [shape = 'u8[131072]{0}', space=vmem, size = 0x20000, scoped, tag = 'output window, operand 0']
    #allocation8 [shape = 'u8[2048]{0}', space=vmem, size = 0x800, scoped, tag = 'output window, operand 1']
    #allocation9 [shape = 's32[2]{0}', space=sflag, size = 0x8, scoped, tag = 'scoped memory for tpu_custom_call.1']
    %9 = vsyncpa [#allocation3], 0
    %s10 = scalar_lea.sflag [#allocation3], 1
    %11 = vsyncpa %s10, 0
    %12 = vsyncpa [#allocation6], 0
    %13 = vsyncpa [#allocation4], 0
    %s14 = scalar_lea.sflag [#allocation4], 1
    %15 = vsyncpa %s14, 0
    %16 = vsyncpa [#allocation9], 0
    %s17 = scalar_lea.sflag [#allocation9], 1
    %18 = vsyncpa %s17, 0
    loop: start=0, step=1, limit=4
    $region2: #{tpu_custom_call.1} parent=1 // loop_pre_header
      _
    $region3: #{tpu_custom_call.1} parent=1 // loop_header
      %s20 = sphi 0, %s24
      %p21 = scmp.ge.s32.totalorder %s20, 4
      %s30 = sphi 0, %s32
      %s33 = sphi 0, %s30
      %s34 = sphi 0, %s33
      %s50 = sphi 0, %s34
      %s54 = sphi 0, %s54
      %s56 = sphi 0, %s54
      %s57 = sphi 0, %s56
      %s71 = sphi 0, %s57
      %s77 = sphi 0, %s79
      %s80 = sphi 0, %s77
      %s81 = sphi 0, %s80
      %s97 = sphi 0, %s81
      %s103 = sphi 0, %s105
      %s106 = sphi 0, %s103
      %s107 = sphi 0, %s106
      %s123 = sphi 0, %s107
    $region4: #{tpu_custom_call.1} parent=1 // loop_header_branch
      %23 = sbr.rel (%p21) target = $region8
    $region5: #{tpu_custom_call.1} parent=1 // loop_body
      %s25 = ssub.s32 %s20, 1
      %s26 = ssub.s32 %s20, 2
      %s27 = sadd.s32 %s20, 1
      %s28 = ssub.s32 %s20, %s27
      %p29 = scmp.eq.s32.totalorder %s28, 0
      %s31 = sadd.s32 %s30, 1
      %s32 = scalar_select %p29, %s30, %s31
      %p35 = pneg %p29
      %p36 = scmp.eq.s32.totalorder %s20, 1
      %p37 = por %p35, %p36
      %p38 = scmp.ne.s32.totalorder %s30, %s33
      %p39 = scmp.eq.s32.totalorder %s20, 0
      %p40 = por %p38, %p39
      %p41 = scmp.ne.s32.totalorder %s30, %s33
      %p42 = scmp.eq.s32.totalorder %s25, 1
      %p43 = por %p41, %p42
      %p44 = scmp.ne.s32.totalorder %s33, %s34
      %p45 = scmp.eq.s32.totalorder %s25, 0
      %p46 = por %p44, %p45
      %p47 = scmp.ne.s32.totalorder %s33, %s34
      %p48 = scmp.eq.s32.totalorder %s26, 1
      %p49 = por %p47, %p48
      %p51 = scmp.ne.s32.totalorder %s34, %s50
      %p52 = scmp.eq.s32.totalorder %s26, 0
      %p53 = por %p51, %p52
      %s55 = sadd.s32 %s54, 1
      %p58 = scmp.eq.s32.totalorder %s20, 1
      %p59 = scmp.ne.s32.totalorder %s54, %s56
      %p60 = scmp.eq.s32.totalorder %s20, 0
      %p61 = por %p59, %p60
      %p62 = scmp.ne.s32.totalorder %s54, %s56
      %p63 = scmp.eq.s32.totalorder %s25, 1
      %p64 = por %p62, %p63
      %p65 = scmp.ne.s32.totalorder %s56, %s57
      %p66 = scmp.eq.s32.totalorder %s25, 0
      %p67 = por %p65, %p66
      %p68 = scmp.ne.s32.totalorder %s56, %s57
      %p69 = scmp.eq.s32.totalorder %s26, 1
      %p70 = por %p68, %p69
      %p72 = scmp.ne.s32.totalorder %s57, %s71
      %p73 = scmp.eq.s32.totalorder %s26, 0
      %p74 = por %p72, %p73
      %s75 = ssub.s32 %s20, %s27
      %p76 = scmp.eq.s32.totalorder %s75, 0
      %s78 = sadd.s32 %s77, 1
      %s79 = scalar_select %p76, %s77, %s78
      %p82 = pneg %p76
      %p83 = scmp.eq.s32.totalorder %s20, 1
      %p84 = por %p82, %p83
      %p85 = scmp.ne.s32.totalorder %s77, %s80
      %p86 = scmp.eq.s32.totalorder %s20, 0
      %p87 = por %p85, %p86
      %p88 = scmp.ne.s32.totalorder %s77, %s80
      %p89 = scmp.eq.s32.totalorder %s25, 1
      %p90 = por %p88, %p89
      %p91 = scmp.ne.s32.totalorder %s80, %s81
      %p92 = scmp.eq.s32.totalorder %s25, 0
      %p93 = por %p91, %p92
      %p94 = scmp.ne.s32.totalorder %s80, %s81
      %p95 = scmp.eq.s32.totalorder %s26, 1
      %p96 = por %p94, %p95
      %p98 = scmp.ne.s32.totalorder %s81, %s97
      %p99 = scmp.eq.s32.totalorder %s26, 0
      %p100 = por %p98, %p99
      %s101 = ssub.s32 %s20, %s27
      %p102 = scmp.eq.s32.totalorder %s101, 0
      %s104 = sadd.s32 %s103, 1
      %s105 = scalar_select %p102, %s103, %s104
      %p108 = pneg %p102
      %p109 = scmp.eq.s32.totalorder %s20, 1
      %p110 = por %p108, %p109
      %p111 = scmp.ne.s32.totalorder %s103, %s106
      %p112 = scmp.eq.s32.totalorder %s20, 0
      %p113 = por %p111, %p112
      %p114 = scmp.ne.s32.totalorder %s103, %s106
      %p115 = scmp.eq.s32.totalorder %s25, 1
      %p116 = por %p114, %p115
      %p117 = scmp.ne.s32.totalorder %s106, %s107
      %p118 = scmp.eq.s32.totalorder %s25, 0
      %p119 = por %p117, %p118
      %p120 = scmp.ne.s32.totalorder %s106, %s107
      %p121 = scmp.eq.s32.totalorder %s26, 1
      %p122 = por %p120, %p121
      %p124 = scmp.ne.s32.totalorder %s107, %s123
      %p125 = scmp.eq.s32.totalorder %s26, 0
      %p126 = por %p124, %p125
      %p127 = scmp.le.s32.totalorder 1, %s20
      %p128 = scmp.lt.s32.totalorder %s20, 3
      %p129 = pnand %p127, %p128
      %p130 = pneg %p129
      // Predicated region
      $region9: #{tpu_custom_call.1} parent=5 // pred_check
        _
      $region10: #{tpu_custom_call.1} parent=5 // pred_check_branch
        %132 = sbr.rel (%p129) target = $region12
      $region11: #{tpu_custom_call.1} parent=5 // pred_region
        %s133 = ssub.s32 %s20, 1
        // Predicated region
        $region13: #{tpu_custom_call.1} parent=11 // pred_check
          %p134 = pneg %p67
        $region14: #{tpu_custom_call.1} parent=11 // pred_check_branch
          %136 = sbr.rel (%p134) target = $region16
        $region15: #{tpu_custom_call.1} parent=11 // pred_region
          %138 = vsyncadd [#allocation6], 0
          %s139 = sshll.u32 %s1, 4
          %s140 = int_to_ptr.hbm [resolvable:$true] %s139
          %s141 = sshll.u32 [#allocation5], 4
          %s142 = int_to_ptr.vmem [resolvable:$true] %s141
          %147 = dma.hbm_to_vmem [thread:$0]  %s140, 1024, %s142, [#allocation6], 64, 64, 4
        $region16: #{tpu_custom_call.1} parent=11 // pred_fallthru
          _
      $region12: #{tpu_custom_call.1} parent=5 // pred_fallthru
        _
      %p148 = scmp.lt.s32.totalorder %s20, 2
      // Predicated region
      $region17: #{tpu_custom_call.1} parent=5 // pred_check
        %p149 = pneg %p148
      $region18: #{tpu_custom_call.1} parent=5 // pred_check_branch
        %151 = sbr.rel (%p149) target = $region20
      $region19: #{tpu_custom_call.1} parent=5 // pred_region
        // Predicated region
        $region21: #{tpu_custom_call.1} parent=19 // pred_check
          %p152 = pneg %p40
        $region22: #{tpu_custom_call.1} parent=19 // pred_check_branch
          %154 = sbr.rel (%p152) target = $region24
        $region23: #{tpu_custom_call.1} parent=19 // pred_region
          %s155 = sand.u32 %s30, 1
          %s156 = scalar_lea.sflag [#allocation3], %s155
          %s157 = sand.u32 %s30, 1
          %s158 = smul.addr %s157, 128
          %s159 = scalar_lea.vmem [#allocation2], %s158
          %s160 = smul.u32 32, %s20
          %162 = vsyncadd %s156, 0
          %s163 = smul.addr %s160, 4
          %s164 = scalar_lea.hbm %s0, %s163
          %s165 = sshll.u32 %s164, 4
          %s166 = int_to_ptr.hbm [resolvable:$true] %s165
          %s167 = sshll.u32 %s159, 4
          %s168 = int_to_ptr.vmem [resolvable:$true] %s167
          %173 = dma.hbm_to_vmem [thread:$0]  %s166, 2048, %s168, %s156, 64, 64, 4
        $region24: #{tpu_custom_call.1} parent=19 // pred_fallthru
          _
      $region20: #{tpu_custom_call.1} parent=5 // pred_fallthru
        _
      %p174 = scmp.le.s32.totalorder 1, %s20
      %p175 = scmp.lt.s32.totalorder %s20, 3
      %p176 = pnand %p174, %p175
      %p177 = pneg %p176
      // Predicated region
      $region25: #{tpu_custom_call.1} parent=5 // pred_check
        _
      $region26: #{tpu_custom_call.1} parent=5 // pred_check_branch
        %179 = sbr.rel (%p176) target = $region28
      $region27: #{tpu_custom_call.1} parent=5 // pred_region
        %s180 = ssub.s32 %s20, 1
        %s181 = sand.u32 %s33, 1
        %s182 = scalar_lea.sflag [#allocation3], %s181
        %s183 = sand.u32 %s33, 1
        %s184 = smul.addr %s183, 128
        %s185 = scalar_lea.vmem [#allocation2], %s184
        // Predicated region
        $region29: #{tpu_custom_call.1} parent=27 // pred_check
          %p186 = pneg %p46
        $region30: #{tpu_custom_call.1} parent=27 // pred_check_branch
          %188 = sbr.rel (%p186) target = $region32
        $region31: #{tpu_custom_call.1} parent=27 // pred_region
          %190 = dma.done %s182, 2048
        $region32: #{tpu_custom_call.1} parent=27 // pred_fallthru
          _
        // Predicated region
        $region33: #{tpu_custom_call.1} parent=27 // pred_check
          %p191 = pneg %p67
        $region34: #{tpu_custom_call.1} parent=27 // pred_check_branch
          %193 = sbr.rel (%p191) target = $region36
        $region35: #{tpu_custom_call.1} parent=27 // pred_region
          %195 = dma.done [#allocation6], 1024
        $region36: #{tpu_custom_call.1} parent=27 // pred_fallthru
          _
        %s196 = sand.u32 %s33, 1
        %s197 = scalar_lea.sflag [#allocation3], %s196
        %s198 = sand.u32 %s33, 1
        %s199 = smul.addr %s198, 128
        %s200 = scalar_lea.vmem [#allocation2], %s199
        %p201 = pneg %p46
        %p202 = pneg %p43
        %p203 = pneg %p67
        %p204 = pneg %p64
        %p205 = pneg %p93
        %p206 = pneg %p90
        %s207 = sand.u32 %s80, 1
        %s208 = scalar_lea.sflag [#allocation4], %s207
        %s209 = sand.u32 %s80, 1
        %s210 = smul.addr %s209, 128
        %s211 = scalar_lea.vmem [#allocation7], %s210
        %p212 = pneg %p119
        %p213 = pneg %p116
        %s214 = sand.u32 %s106, 1
        %s215 = scalar_lea.sflag [#allocation9], %s214
        %s216 = sand.u32 %s106, 1
        %s217 = smul.addr %s216, 2
        %s218 = scalar_lea.vmem [#allocation8], %s217
        %s219 = smul.u32 32, %s25
        %s220 = smul.u32 32, %s25
        %v221 = vld [vmem:[%s185] sm:$0xf]
        %v222 = vld [vmem:[%s185 + $0x4] sm:$0xf]
        %v223 = vld [vmem:[%s185 + $0x8] sm:$0xf]
        %v224 = vld [vmem:[%s185 + $0xc] sm:$0xf]
        %v225 = vld [vmem:[%s185 + $0x10] sm:$0xf]
        %v226 = vld [vmem:[%s185 + $0x14] sm:$0xf]
        %v227 = vld [vmem:[%s185 + $0x18] sm:$0xf]
        %v228 = vld [vmem:[%s185 + $0x1c] sm:$0xf]
        %v229 = vld [vmem:[%s185 + $0x20] sm:$0xf]
        %v230 = vld [vmem:[%s185 + $0x24] sm:$0xf]
        %v231 = vld [vmem:[%s185 + $0x28] sm:$0xf]
        %v232 = vld [vmem:[%s185 + $0x2c] sm:$0xf]
        %v233 = vld [vmem:[%s185 + $0x30] sm:$0xf]
        %v234 = vld [vmem:[%s185 + $0x34] sm:$0xf]
        %v235 = vld [vmem:[%s185 + $0x38] sm:$0xf]
        %v236 = vld [vmem:[%s185 + $0x3c] sm:$0xf]
        %v237 = vld [vmem:[%s185 + $0x40] sm:$0xf]
        %v238 = vld [vmem:[%s185 + $0x44] sm:$0xf]
        %v239 = vld [vmem:[%s185 + $0x48] sm:$0xf]
        %v240 = vld [vmem:[%s185 + $0x4c] sm:$0xf]
        %v241 = vld [vmem:[%s185 + $0x50] sm:$0xf]
        %v242 = vld [vmem:[%s185 + $0x54] sm:$0xf]
        %v243 = vld [vmem:[%s185 + $0x58] sm:$0xf]
        %v244 = vld [vmem:[%s185 + $0x5c] sm:$0xf]
        %v245 = vld [vmem:[%s185 + $0x60] sm:$0xf]
        %v246 = vld [vmem:[%s185 + $0x64] sm:$0xf]
        %v247 = vld [vmem:[%s185 + $0x68] sm:$0xf]
        %v248 = vld [vmem:[%s185 + $0x6c] sm:$0xf]
        %v249 = vld [vmem:[%s185 + $0x70] sm:$0xf]
        %v250 = vld [vmem:[%s185 + $0x74] sm:$0xf]
        %v251 = vld [vmem:[%s185 + $0x78] sm:$0xf]
        %v252 = vld [vmem:[%s185 + $0x7c] sm:$0xf]
        %v253 = vld [vmem:[#allocation5] sm:$0xf]
        %v254 = vld [vmem:[#allocation5 + $0x4] sm:$0xf]
        %v255 = vld [vmem:[#allocation5 + $0x8] sm:$0xf]
        %v256 = vld [vmem:[#allocation5 + $0xc] sm:$0xf]
        %v257 = vld [vmem:[#allocation5 + $0x10] sm:$0xf]
        %v258 = vld [vmem:[#allocation5 + $0x14] sm:$0xf]
        %v259 = vld [vmem:[#allocation5 + $0x18] sm:$0xf]
        %v260 = vld [vmem:[#allocation5 + $0x1c] sm:$0xf]
        %v261 = vld [vmem:[#allocation5 + $0x20] sm:$0xf]
        %v262 = vld [vmem:[#allocation5 + $0x24] sm:$0xf]
        %v263 = vld [vmem:[#allocation5 + $0x28] sm:$0xf]
        %v264 = vld [vmem:[#allocation5 + $0x2c] sm:$0xf]
        %v265 = vld [vmem:[#allocation5 + $0x30] sm:$0xf]
        %v266 = vld [vmem:[#allocation5 + $0x34] sm:$0xf]
        %v267 = vld [vmem:[#allocation5 + $0x38] sm:$0xf]
        %v268 = vld [vmem:[#allocation5 + $0x3c] sm:$0xf]
        %v301 = vunpack.c.l.b16 %v221
        %v302 = vunpack.c.l.b16 %v222
        %v303 = vunpack.c.l.b16 %v223
        %v304 = vunpack.c.l.b16 %v224
        %v305 = vunpack.c.l.b16 %v225
        %v306 = vunpack.c.l.b16 %v226
        %v307 = vunpack.c.l.b16 %v227
        %v308 = vunpack.c.l.b16 %v228
        %v309 = vunpack.c.l.b16 %v229
        %v310 = vunpack.c.l.b16 %v230
        %v311 = vunpack.c.l.b16 %v231
        %v312 = vunpack.c.l.b16 %v232
        %v313 = vunpack.c.l.b16 %v233
        %v314 = vunpack.c.l.b16 %v234
        %v315 = vunpack.c.l.b16 %v235
        %v316 = vunpack.c.l.b16 %v236
        %v317 = vunpack.c.l.b16 %v237
        %v318 = vunpack.c.l.b16 %v238
        %v319 = vunpack.c.l.b16 %v239
        %v320 = vunpack.c.l.b16 %v240
        %v321 = vunpack.c.l.b16 %v241
        %v322 = vunpack.c.l.b16 %v242
        %v323 = vunpack.c.l.b16 %v243
        %v324 = vunpack.c.l.b16 %v244
        %v325 = vunpack.c.l.b16 %v245
        %v326 = vunpack.c.l.b16 %v246
        %v327 = vunpack.c.l.b16 %v247
        %v328 = vunpack.c.l.b16 %v248
        %v329 = vunpack.c.l.b16 %v249
        %v330 = vunpack.c.l.b16 %v250
        %v331 = vunpack.c.l.b16 %v251
        %v332 = vunpack.c.l.b16 %v252
        %v333 = vpack.c.b16 %v302, %v301
        %v334 = vpack.c.b16 %v304, %v303
        %v335 = vpack.c.b16 %v306, %v305
        %v336 = vpack.c.b16 %v308, %v307
        %v337 = vpack.c.b16 %v310, %v309
        %v338 = vpack.c.b16 %v312, %v311
        %v339 = vpack.c.b16 %v314, %v313
        %v340 = vpack.c.b16 %v316, %v315
        %v341 = vpack.c.b16 %v318, %v317
        %v342 = vpack.c.b16 %v320, %v319
        %v343 = vpack.c.b16 %v322, %v321
        %v344 = vpack.c.b16 %v324, %v323
        %v345 = vpack.c.b16 %v326, %v325
        %v346 = vpack.c.b16 %v328, %v327
        %v347 = vpack.c.b16 %v330, %v329
        %v348 = vpack.c.b16 %v332, %v331
        %v381 = vunpack.c.l.b16 %v253
        %v382 = vunpack.c.l.b16 %v254
        %v383 = vunpack.c.l.b16 %v255
        %v384 = vunpack.c.l.b16 %v256
        %v385 = vunpack.c.l.b16 %v257
        %v386 = vunpack.c.l.b16 %v258
        %v387 = vunpack.c.l.b16 %v259
        %v388 = vunpack.c.l.b16 %v260
        %v389 = vunpack.c.l.b16 %v261
        %v390 = vunpack.c.l.b16 %v262
        %v391 = vunpack.c.l.b16 %v263
        %v392 = vunpack.c.l.b16 %v264
        %v393 = vunpack.c.l.b16 %v265
        %v394 = vunpack.c.l.b16 %v266
        %v395 = vunpack.c.l.b16 %v267
        %v396 = vunpack.c.l.b16 %v268
        %v397 = vpack.c.b16 %v382, %v381
        %v398 = vpack.c.b16 %v384, %v383
        %v399 = vpack.c.b16 %v386, %v385
        %v400 = vpack.c.b16 %v388, %v387
        %v401 = vpack.c.b16 %v390, %v389
        %v402 = vpack.c.b16 %v392, %v391
        %v403 = vpack.c.b16 %v394, %v393
        %v404 = vpack.c.b16 %v396, %v395
        %413 = vmatpush.bf16.msra.mxu0 %v404
        %414 = vmatpush.bf16.msra.mxu0 %v403
        %415 = vmatpush.bf16.msra.mxu0 %v402
        %416 = vmatpush.bf16.msra.mxu0 %v401
        %417 = vmatpush.bf16.msra.mxu0 %v400
        %418 = vmatpush.bf16.msra.mxu0 %v399
        %419 = vmatpush.bf16.msra.mxu0 %v398
        %420 = vmatpush.bf16.msra.mxu0 %v397
        %421 = vmatmul.bf16.gmra.mxu0 %v333
        %v422 = vpop.f32.mrf.mxu0
        %v423 = vadd.f32 0.0, %v422
        %v424 = vpop.f32.mrf.mxu0
        %v425 = vadd.f32 0.0, %v424
        %426 = vmatmul.bf16.gmra.mxu0 %v334
        %v427 = vpop.f32.mrf.mxu0
        %v428 = vadd.f32 0.0, %v427
        %v429 = vpop.f32.mrf.mxu0
        %v430 = vadd.f32 0.0, %v429
        %431 = vmatmul.bf16.gmra.mxu0 %v335
        %v432 = vpop.f32.mrf.mxu0
        %v433 = vadd.f32 0.0, %v432
        %v434 = vpop.f32.mrf.mxu0
        %v435 = vadd.f32 0.0, %v434
        %436 = vmatmul.bf16.gmra.mxu0 %v336
        %v437 = vpop.f32.mrf.mxu0
        %v438 = vadd.f32 0.0, %v437
        %v439 = vpop.f32.mrf.mxu0
        %v440 = vadd.f32 0.0, %v439
        %441 = vmatmul.bf16.gmra.mxu0 %v337
        %v442 = vpop.f32.mrf.mxu0
        %v443 = vadd.f32 0.0, %v442
        %v444 = vpop.f32.mrf.mxu0
        %v445 = vadd.f32 0.0, %v444
        %446 = vmatmul.bf16.gmra.mxu0 %v338
        %v447 = vpop.f32.mrf.mxu0
        %v448 = vadd.f32 0.0, %v447
        %v449 = vpop.f32.mrf.mxu0
        %v450 = vadd.f32 0.0, %v449
        %451 = vmatmul.bf16.gmra.mxu0 %v339
        %v452 = vpop.f32.mrf.mxu0
        %v453 = vadd.f32 0.0, %v452
        %v454 = vpop.f32.mrf.mxu0
        %v455 = vadd.f32 0.0, %v454
        %456 = vmatmul.bf16.gmra.mxu0 %v340
        %v457 = vpop.f32.mrf.mxu0
        %v458 = vadd.f32 0.0, %v457
        %v459 = vpop.f32.mrf.mxu0
        %v460 = vadd.f32 0.0, %v459
        %461 = vmatmul.bf16.gmra.mxu0 %v341
        %v462 = vpop.f32.mrf.mxu0
        %v463 = vadd.f32 0.0, %v462
        %v464 = vpop.f32.mrf.mxu0
        %v465 = vadd.f32 0.0, %v464
        %466 = vmatmul.bf16.gmra.mxu0 %v342
        %v467 = vpop.f32.mrf.mxu0
        %v468 = vadd.f32 0.0, %v467
        %v469 = vpop.f32.mrf.mxu0
        %v470 = vadd.f32 0.0, %v469
        %471 = vmatmul.bf16.gmra.mxu0 %v343
        %v472 = vpop.f32.mrf.mxu0
        %v473 = vadd.f32 0.0, %v472
        %v474 = vpop.f32.mrf.mxu0
        %v475 = vadd.f32 0.0, %v474
        %476 = vmatmul.bf16.gmra.mxu0 %v344
        %v477 = vpop.f32.mrf.mxu0
        %v478 = vadd.f32 0.0, %v477
        %v479 = vpop.f32.mrf.mxu0
        %v480 = vadd.f32 0.0, %v479
        %481 = vmatmul.bf16.gmra.mxu0 %v345
        %v482 = vpop.f32.mrf.mxu0
        %v483 = vadd.f32 0.0, %v482
        %v484 = vpop.f32.mrf.mxu0
        %v485 = vadd.f32 0.0, %v484
        %486 = vmatmul.bf16.gmra.mxu0 %v346
        %v487 = vpop.f32.mrf.mxu0
        %v488 = vadd.f32 0.0, %v487
        %v489 = vpop.f32.mrf.mxu0
        %v490 = vadd.f32 0.0, %v489
        %491 = vmatmul.bf16.gmra.mxu0 %v347
        %v492 = vpop.f32.mrf.mxu0
        %v493 = vadd.f32 0.0, %v492
        %v494 = vpop.f32.mrf.mxu0
        %v495 = vadd.f32 0.0, %v494
        %496 = vmatmul.bf16.gmra.mxu0 %v348
        %v497 = vpop.f32.mrf.mxu0
        %v498 = vadd.f32 0.0, %v497
        %v499 = vpop.f32.mrf.mxu0
        %v500 = vadd.f32 0.0, %v499
        %501 = vdwg.mxu0
        %v502 = vpack.c.bf16 %v423, %v423
        %v503 = vpack.c.bf16 %v425, %v425
        %v504 = vpack.c.bf16 %v428, %v428
        %v505 = vpack.c.bf16 %v430, %v430
        %v506 = vpack.c.bf16 %v433, %v433
        %v507 = vpack.c.bf16 %v435, %v435
        %v508 = vpack.c.bf16 %v438, %v438
        %v509 = vpack.c.bf16 %v440, %v440
        %v510 = vpack.c.bf16 %v443, %v443
        %v511 = vpack.c.bf16 %v445, %v445
        %v512 = vpack.c.bf16 %v448, %v448
        %v513 = vpack.c.bf16 %v450, %v450
        %v514 = vpack.c.bf16 %v453, %v453
        %v515 = vpack.c.bf16 %v455, %v455
        %v516 = vpack.c.bf16 %v458, %v458
        %v517 = vpack.c.bf16 %v460, %v460
        %v518 = vpack.c.bf16 %v463, %v463
        %v519 = vpack.c.bf16 %v465, %v465
        %v520 = vpack.c.bf16 %v468, %v468
        %v521 = vpack.c.bf16 %v470, %v470
        %v522 = vpack.c.bf16 %v473, %v473
        %v523 = vpack.c.bf16 %v475, %v475
        %v524 = vpack.c.bf16 %v478, %v478
        %v525 = vpack.c.bf16 %v480, %v480
        %v526 = vpack.c.bf16 %v483, %v483
        %v527 = vpack.c.bf16 %v485, %v485
        %v528 = vpack.c.bf16 %v488, %v488
        %v529 = vpack.c.bf16 %v490, %v490
        %v530 = vpack.c.bf16 %v493, %v493
        %v531 = vpack.c.bf16 %v495, %v495
        %v532 = vpack.c.bf16 %v498, %v498
        %v533 = vpack.c.bf16 %v500, %v500
        %534 = vst [vmem:[%s211] sm:$0xf] %v502
        %535 = vst [vmem:[%s211 + $0x4] sm:$0xf] %v503
        %536 = vst [vmem:[%s211 + $0x8] sm:$0xf] %v504
        %537 = vst [vmem:[%s211 + $0xc] sm:$0xf] %v505
        %538 = vst [vmem:[%s211 + $0x10] sm:$0xf] %v506
        %539 = vst [vmem:[%s211 + $0x14] sm:$0xf] %v507
        %540 = vst [vmem:[%s211 + $0x18] sm:$0xf] %v508
        %541 = vst [vmem:[%s211 + $0x1c] sm:$0xf] %v509
        %542 = vst [vmem:[%s211 + $0x20] sm:$0xf] %v510
        %543 = vst [vmem:[%s211 + $0x24] sm:$0xf] %v511
        %544 = vst [vmem:[%s211 + $0x28] sm:$0xf] %v512
        %545 = vst [vmem:[%s211 + $0x2c] sm:$0xf] %v513
        %546 = vst [vmem:[%s211 + $0x30] sm:$0xf] %v514
        %547 = vst [vmem:[%s211 + $0x34] sm:$0xf] %v515
        %548 = vst [vmem:[%s211 + $0x38] sm:$0xf] %v516
        %549 = vst [vmem:[%s211 + $0x3c] sm:$0xf] %v517
        %550 = vst [vmem:[%s211 + $0x40] sm:$0xf] %v518
        %551 = vst [vmem:[%s211 + $0x44] sm:$0xf] %v519
        %552 = vst [vmem:[%s211 + $0x48] sm:$0xf] %v520
        %553 = vst [vmem:[%s211 + $0x4c] sm:$0xf] %v521
        %554 = vst [vmem:[%s211 + $0x50] sm:$0xf] %v522
        %555 = vst [vmem:[%s211 + $0x54] sm:$0xf] %v523
        %556 = vst [vmem:[%s211 + $0x58] sm:$0xf] %v524
        %557 = vst [vmem:[%s211 + $0x5c] sm:$0xf] %v525
        %558 = vst [vmem:[%s211 + $0x60] sm:$0xf] %v526
        %559 = vst [vmem:[%s211 + $0x64] sm:$0xf] %v527
        %560 = vst [vmem:[%s211 + $0x68] sm:$0xf] %v528
        %561 = vst [vmem:[%s211 + $0x6c] sm:$0xf] %v529
        %562 = vst [vmem:[%s211 + $0x70] sm:$0xf] %v530
        %563 = vst [vmem:[%s211 + $0x74] sm:$0xf] %v531
        %564 = vst [vmem:[%s211 + $0x78] sm:$0xf] %v532
        %565 = vst [vmem:[%s211 + $0x7c] sm:$0xf] %v533
        %v566 = vadd.f32 %v423, %v425
        %v567 = vadd.f32 %v566, %v428
        %v568 = vadd.f32 %v567, %v430
        %v569 = vadd.f32 %v568, %v433
        %v570 = vadd.f32 %v569, %v435
        %v571 = vadd.f32 %v570, %v438
        %v572 = vadd.f32 %v571, %v440
        %v573 = vadd.f32 %v572, %v443
        %v574 = vadd.f32 %v573, %v445
        %v575 = vadd.f32 %v574, %v448
        %v576 = vadd.f32 %v575, %v450
        %v577 = vadd.f32 %v576, %v453
        %v578 = vadd.f32 %v577, %v455
        %v579 = vadd.f32 %v578, %v458
        %v580 = vadd.f32 %v579, %v460
        %v581 = vadd.f32 %v580, %v463
        %v582 = vadd.f32 %v581, %v465
        %v583 = vadd.f32 %v582, %v468
        %v584 = vadd.f32 %v583, %v470
        %v585 = vadd.f32 %v584, %v473
        %v586 = vadd.f32 %v585, %v475
        %v587 = vadd.f32 %v586, %v478
        %v588 = vadd.f32 %v587, %v480
        %v589 = vadd.f32 %v588, %v483
        %v590 = vadd.f32 %v589, %v485
        %v591 = vadd.f32 %v590, %v488
        %v592 = vadd.f32 %v591, %v490
        %v593 = vadd.f32 %v592, %v493
        %v594 = vadd.f32 %v593, %v495
        %v595 = vadd.f32 %v594, %v498
        %v596 = vadd.f32 %v595, %v500
        %v597 = vrot.slane %v596, 4
        %v598 = vadd.f32 %v596, %v597
        %v599 = vrot.slane %v598, 2
        %v600 = vadd.f32 %v598, %v599
        %v601 = vrot.slane %v600, 1
        %v602 = vadd.f32 %v600, %v601
        %v603 = vmul.f32 %v423, %v423
        %v604 = vmul.f32 %v425, %v425
        %v605 = vmul.f32 %v428, %v428
        %v606 = vmul.f32 %v430, %v430
        %v607 = vmul.f32 %v433, %v433
        %v608 = vmul.f32 %v435, %v435
        %v609 = vmul.f32 %v438, %v438
        %v610 = vmul.f32 %v440, %v440
        %v611 = vmul.f32 %v443, %v443
        %v612 = vmul.f32 %v445, %v445
        %v613 = vmul.f32 %v448, %v448
        %v614 = vmul.f32 %v450, %v450
        %v615 = vmul.f32 %v453, %v453
        %v616 = vmul.f32 %v455, %v455
        %v617 = vmul.f32 %v458, %v458
        %v618 = vmul.f32 %v460, %v460
        %v619 = vmul.f32 %v463, %v463
        %v620 = vmul.f32 %v465, %v465
        %v621 = vmul.f32 %v468, %v468
        %v622 = vmul.f32 %v470, %v470
        %v623 = vmul.f32 %v473, %v473
        %v624 = vmul.f32 %v475, %v475
        %v625 = vmul.f32 %v478, %v478
        %v626 = vmul.f32 %v480, %v480
        %v627 = vmul.f32 %v483, %v483
        %v628 = vmul.f32 %v485, %v485
        %v629 = vmul.f32 %v488, %v488
        %v630 = vmul.f32 %v490, %v490
        %v631 = vmul.f32 %v493, %v493
        %v632 = vmul.f32 %v495, %v495
        %v633 = vmul.f32 %v498, %v498
        %v634 = vmul.f32 %v500, %v500
        %v635 = vadd.f32 %v603, %v604
        %v636 = vadd.f32 %v635, %v605
        %v637 = vadd.f32 %v636, %v606
        %v638 = vadd.f32 %v637, %v607
        %v639 = vadd.f32 %v638, %v608
        %v640 = vadd.f32 %v639, %v609
        %v641 = vadd.f32 %v640, %v610
        %v642 = vadd.f32 %v641, %v611
        %v643 = vadd.f32 %v642, %v612
        %v644 = vadd.f32 %v643, %v613
        %v645 = vadd.f32 %v644, %v614
        %v646 = vadd.f32 %v645, %v615
        %v647 = vadd.f32 %v646, %v616
        %v648 = vadd.f32 %v647, %v617
        %v649 = vadd.f32 %v648, %v618
        %v650 = vadd.f32 %v649, %v619
        %v651 = vadd.f32 %v650, %v620
        %v652 = vadd.f32 %v651, %v621
        %v653 = vadd.f32 %v652, %v622
        %v654 = vadd.f32 %v653, %v623
        %v655 = vadd.f32 %v654, %v624
        %v656 = vadd.f32 %v655, %v625
        %v657 = vadd.f32 %v656, %v626
        %v658 = vadd.f32 %v657, %v627
        %v659 = vadd.f32 %v658, %v628
        %v660 = vadd.f32 %v659, %v629
        %v661 = vadd.f32 %v660, %v630
        %v662 = vadd.f32 %v661, %v631
        %v663 = vadd.f32 %v662, %v632
        %v664 = vadd.f32 %v663, %v633
        %v665 = vadd.f32 %v664, %v634
        %v666 = vrot.slane %v665, 4
        %v667 = vadd.f32 %v665, %v666
        %v668 = vrot.slane %v667, 2
        %v669 = vadd.f32 %v667, %v668
        %v670 = vrot.slane %v669, 1
        %v671 = vadd.f32 %v669, %v670
        %vm672 = vcmask 1040384
        %v673 = vsel %vm672, %v602, %v671
        %674 = vst [vmem:[%s218] sm:$0x3] %v673
        %s675 = sand.u32 %s80, 1
        %s676 = scalar_lea.sflag [#allocation4], %s675
        %s677 = sand.u32 %s80, 1
        %s678 = smul.addr %s677, 128
        %s679 = scalar_lea.vmem [#allocation7], %s678
        %s680 = sand.u32 %s106, 1
        %s681 = scalar_lea.sflag [#allocation9], %s680
        %s682 = sand.u32 %s106, 1
        %s683 = smul.addr %s682, 2
        %s684 = scalar_lea.vmem [#allocation8], %s683
        // Predicated region
        $region37: #{tpu_custom_call.1} parent=27 // pred_check
          %p685 = pneg %p90
        $region38: #{tpu_custom_call.1} parent=27 // pred_check_branch
          %687 = sbr.rel (%p685) target = $region40
        $region39: #{tpu_custom_call.1} parent=27 // pred_region
          %s688 = smul.u32 32, %s25
          %690 = vsyncadd %s676, 0
          %s691 = smul.addr %s688, 4
          %s692 = scalar_lea.hbm %s2, %s691
          %s693 = sshll.u32 %s679, 4
          %s694 = int_to_ptr.vmem [resolvable:$true] %s693
          %s695 = sshll.u32 %s692, 4
          %s696 = int_to_ptr.hbm [resolvable:$true] %s695
          %701 = dma.vmem_to_hbm [thread:$0]  %s694, 2048, %s696, %s676, 64, 64, 4
        $region40: #{tpu_custom_call.1} parent=27 // pred_fallthru
          _
        // Predicated region
        $region41: #{tpu_custom_call.1} parent=27 // pred_check
          %p702 = pneg %p116
        $region42: #{tpu_custom_call.1} parent=27 // pred_check_branch
          %704 = sbr.rel (%p702) target = $region44
        $region43: #{tpu_custom_call.1} parent=27 // pred_region
          %706 = vsyncadd %s681, 0
          %s707 = smul.addr %s25, 2
          %s708 = scalar_lea.hbm %s3, %s707
          %s710 = sshll.u32 %s684, 4
          %s711 = int_to_ptr.vmem [resolvable:$true] %s710
          %s712 = sshll.u32 %s708, 4
          %s713 = int_to_ptr.hbm [resolvable:$true] %s712
          %715 = dma.vmem_to_hbm [thread:$0]  %s711, 32, %s713, %s681
        $region44: #{tpu_custom_call.1} parent=27 // pred_fallthru
          _
      $region28: #{tpu_custom_call.1} parent=5 // pred_fallthru
        _
      %p716 = scmp.le.s32.totalorder 2, %s20
      // Predicated region
      $region45: #{tpu_custom_call.1} parent=5 // pred_check
        %p717 = pneg %p716
      $region46: #{tpu_custom_call.1} parent=5 // pred_check_branch
        %719 = sbr.rel (%p717) target = $region48
      $region47: #{tpu_custom_call.1} parent=5 // pred_region
        %s720 = ssub.s32 %s20, 2
        // Predicated region
        $region49: #{tpu_custom_call.1} parent=47 // pred_check
          %p721 = pneg %p96
        $region50: #{tpu_custom_call.1} parent=47 // pred_check_branch
          %723 = sbr.rel (%p721) target = $region52
        $region51: #{tpu_custom_call.1} parent=47 // pred_region
          %s724 = sand.u32 %s81, 1
          %s725 = scalar_lea.sflag [#allocation4], %s724
          %s726 = sand.u32 %s81, 1
          %s727 = smul.addr %s726, 128
          %s728 = scalar_lea.vmem [#allocation7], %s727
          %730 = dma.done %s725, 2048
        $region52: #{tpu_custom_call.1} parent=47 // pred_fallthru
          _
        // Predicated region
        $region53: #{tpu_custom_call.1} parent=47 // pred_check
          %p731 = pneg %p122
        $region54: #{tpu_custom_call.1} parent=47 // pred_check_branch
          %733 = sbr.rel (%p731) target = $region56
        $region55: #{tpu_custom_call.1} parent=47 // pred_region
          %s734 = sand.u32 %s107, 1
          %s735 = scalar_lea.sflag [#allocation9], %s734
          %s736 = sand.u32 %s107, 1
          %s737 = smul.addr %s736, 2
          %s738 = scalar_lea.vmem [#allocation8], %s737
          %740 = dma.done %s735, 32
        $region56: #{tpu_custom_call.1} parent=47 // pred_fallthru
          _
      $region48: #{tpu_custom_call.1} parent=5 // pred_fallthru
        _
    $region6: #{tpu_custom_call.1} parent=1 // loop_footer
      %s24 = sadd.s32 1, %s20
    $region7: #{tpu_custom_call.1} parent=1 // loop_footer_branch
      %19 = sbr.rel target = $region3
    $region8: #{tpu_custom_call.1} parent=1 // loop_exit
      _
    %741 = vsyncpa [#allocation3], 1
    %s742 = scalar_lea.sflag [#allocation3], 1
    %743 = vsyncpa %s742, 1
    %744 = vsyncpa [#allocation6], 1
    %745 = vsyncpa [#allocation4], 1
    %s746 = scalar_lea.sflag [#allocation4], 1
    %747 = vsyncpa %s746, 1
    %748 = vsyncpa [#allocation9], 1
    %s749 = scalar_lea.sflag [#allocation9], 1
    %750 = vsyncpa %s749, 1

</llo_original>
